<compile_context>
chip_gen: v7x
topology: tpu7x:2x2x1
jax: 0.10.0
libtpu: 0.0.40
codegen_flags: <defaults>
</compile_context>

<pallas_src>
import math

import jax
import jax.numpy as jnp
from jax.experimental import pallas as pl
from jax.experimental.pallas import tpu as pltpu

# ----------------------------- configuration -------------------------------
VOCAB = 64          # vocab_size
D = 48              # hiddens
H = 6               # nheads (default)
DH = D // H         # per-head hidden
C = 4               # nclass
P = 2               # norep (default 2)
CP = C + P
L = 8               # sequence length
B = 2               # batch
MAXF = 20
LN_EPS = 1e-5       # torch.nn.LayerNorm default eps
LANES = 128

# packed per-document data slab (rows x 128 lanes)
ROW_K, ROW_Q, ROW_V, ROW_AUX = 0, L, 2 * L, 3 * L
COL_MASK, COL_SCALE, COL_MADD = 0, L, L + 1
DATA_R = 4 * L                                 # 32 rows

# packed constant parameter slab (rows x 128 lanes)
ROW_WFC, ROW_G, ROW_GT = 0, D, 2 * D
ROW_GAMMA, ROW_BETA, ROW_BIAS = 2 * D + H, 2 * D + H + 1, 2 * D + H + 2
SLAB_R = 112                                   # >= 105, multiple of 8

OUT_R = 2 * L                                  # rows 0:L t_probs, row L logits


# ------------------------------ Pallas kernel ------------------------------
def attention_tfidf_kernel(data_ref, const_ref, out_ref):
    # ---- per-document packed inputs (one lane-dense slab, one DMA) ----
    blk = data_ref[0]                                            # (4L, 128)
    k = blk[ROW_K:ROW_K + L, 0:D]                                # (L, D)
    q = blk[ROW_Q:ROW_Q + L, 0:D]
    v = blk[ROW_V:ROW_V + L, 0:D]
    mask = blk[ROW_AUX:ROW_AUX + L, COL_MASK:COL_MASK + L]       # (Li, Lj) 0/1
    scale = blk[ROW_AUX:ROW_AUX + L, COL_SCALE:COL_SCALE + 1]    # (L, 1) 1/doc_size
    madd = blk[ROW_AUX:ROW_AUX + L, COL_MADD:COL_MADD + 1]       # (L, 1) 0 or -inf

    # ---- packed constants (block index constant over the grid -> fetched once) ----
    wfc = const_ref[ROW_WFC:ROW_WFC + D, 0:CP]                   # (D, CP) fc weight^T
    g = const_ref[ROW_G:ROW_G + D, 0:H]                          # (D, H) lane->head
    gt = const_ref[ROW_GT:ROW_GT + H, 0:D]                       # (H, D)
    gamma = const_ref[ROW_GAMMA:ROW_GAMMA + 1, 0:H]              # (1, H)
    beta = const_ref[ROW_BETA:ROW_BETA + 1, 0:H]                 # (1, H)
    bias = const_ref[ROW_BIAS:ROW_BIAS + 1, 0:CP]                # (1, CP)

    # ---- DistMatrix: per-head pairwise euclidean distance, heads on lanes ----
    # TODO(synk): DistMatrix source not provided; using torch.cdist(K, Q) semantics.
    # NOTE: O(L^2*D) materialization is fine at L=8 only (review items 4/5).
    diff = k[:, None, :] - q[None, :, :]                         # (Li, Lj, D)
    dist2 = jnp.dot((diff * diff).reshape(L * L, D), g,
                    preferred_element_type=jnp.float32)          # per-head sums
    co = jnp.sqrt(dist2).reshape(L, L, H)                        # (Li, Lj, H)

    # ---- lnormalize: LayerNorm over the head axis (last/lane axis here) ----
    mu = jnp.mean(co, axis=-1, keepdims=True)
    var = jnp.mean((co - mu) ** 2, axis=-1, keepdims=True)
    co = (co - mu) * jax.lax.rsqrt(var + LN_EPS) * gamma + beta

    # ---- zero padded pairs, softmax over keys.  The reference's removeNaN here is
    #      provably dead (denominator = sum of L positive exponentials), so it is
    #      dropped; the divide is exact (no approx reciprocal). ----
    co = jnp.where(mask[:, :, None] > 0.5, co, 0.0)
    ce = jnp.exp(co - jnp.max(co, axis=1, keepdims=True))
    att = ce / jnp.sum(ce, axis=1, keepdims=True)                # (Li, Lj, H)

    # ---- context = att @ V: broadcast each head weight over its DH lanes via the
    #      indicator matmul, then weight V and reduce over keys ----
    att_exp = jnp.dot(att.reshape(L * L, H), gt,
                      preferred_element_type=jnp.float32).reshape(L, L, D)
    ctx = jnp.sum(att_exp * v[None, :, :], axis=1)               # (L, D) == catHiddens
    # (dropout is identity at inference)

    # ---- fc (Linear D -> C+P) + softmax ----
    lg = jnp.dot(ctx, wfc, preferred_element_type=jnp.float32) + bias
    le = jnp.exp(lg - jnp.max(lg, axis=-1, keepdims=True))
    t_probs = le / jnp.sum(le, axis=-1, keepdims=True)           # (L, CP)

    # ---- token weights: sum over queries, mean over heads, /doc_size, -inf on
    #      packed positions, softmax over tokens, removeNaN (kept: an all-padded
    #      document really does hit NaN here, matching the reference) ----
    w = jnp.mean(jnp.sum(att, axis=0), axis=-1, keepdims=True)   # (L, 1)
    w = w * scale + madd
    we = jnp.exp(w - jnp.max(w, axis=0, keepdims=True))
    w = we / jnp.sum(we, axis=0, keepdims=True)
    w = jnp.where(jnp.isnan(w), 0.0, w)

    # ---- document logits: weighted sum of token probs, slice to C, softmax ----
    full = jnp.sum(t_probs * w, axis=0, keepdims=True)           # (1, CP)
    lc = full[:, 0:C]
    lce = jnp.exp(lc - jnp.max(lc, axis=-1, keepdims=True))
    logits = lce / jnp.sum(lce, axis=-1, keepdims=True)          # (1, C)

    # ---- single lane-dense output block (aligned, unmasked full-tile stores):
    #      rows 0:L cols 0:CP -> t_probs, rows L:2L cols 0:C -> logits ----
    t_pad = jnp.concatenate(
        [t_probs, jnp.zeros((L, LANES - CP), jnp.float32)], axis=1)      # (L, 128)
    l_pad = jnp.concatenate(
        [jnp.broadcast_to(logits, (L, C)),
         jnp.zeros((L, LANES - C), jnp.float32)], axis=1)                # (L, 128)
    out_ref[...] = jnp.concatenate([t_pad, l_pad], axis=0)[None]         # (1, 2L, 128)


# ------------------------ glue: EmbbedingTFIDF (JAX) ------------------------
def embedding_tfidf(params, doc_tids, TFs, DFs):
    # TODO(synk): EmbbedingTFIDF source not provided; deterministic reconstruction:
    #             one embedding table split into K/Q/V, scaled by a TF-IDF weight,
    #             token id 0 = padding.
    pad = (doc_tids != 0)                                        # (B, L) valid mask
    emb = params["emb"][doc_tids]                                # (B, L, 3D)
    tfw = jnp.log1p(jnp.minimum(TFs, MAXF).astype(jnp.float32))
    idf = 1.0 / jnp.log1p(DFs.astype(jnp.float32))
    emb = emb * (tfw * idf)[..., None] * pad[..., None].astype(jnp.float32)
    K, Q, V = jnp.split(emb, 3, axis=-1)                         # each (B, L, D)
    pad_mask = (pad[:, :, None] & pad[:, None, :]).astype(jnp.float32)   # (B, L, L)
    doc_sizes = jnp.sum(pad, axis=-1).astype(jnp.float32)        # (B,)
    bx_packed = (~pad).astype(jnp.float32)                       # (B, L)
    return K, Q, V, pad_mask, doc_sizes, bx_packed, pad


@jax.jit
def attention_tfidf_forward(params, doc_tids, TFs, DFs):
    K, Q, V, pad_mask, doc_sizes, bx_packed, _ = embedding_tfidf(
        params, doc_tids, TFs, DFs)

    # per-document data slab (review item 1: collapse the input DMAs)
    scale = jnp.broadcast_to((1.0 / doc_sizes)[:, None], (B, L))
    madd = jnp.where(bx_packed > 0.5, -jnp.inf, 0.0)   # all-padded doc -> NaN later,
                                                       # same behavior as reference
    data = jnp.zeros((B, DATA_R, LANES), jnp.float32)
    data = data.at[:, ROW_K:ROW_K + L, 0:D].set(K)
    data = data.at[:, ROW_Q:ROW_Q + L, 0:D].set(Q)
    data = data.at[:, ROW_V:ROW_V + L, 0:D].set(V)
    data = data.at[:, ROW_AUX:ROW_AUX + L, COL_MASK:COL_MASK + L].set(pad_mask)
    data = data.at[:, ROW_AUX:ROW_AUX + L, COL_SCALE].set(scale)
    data = data.at[:, ROW_AUX:ROW_AUX + L, COL_MADD].set(madd)

    # constant parameter slab (head-indicator matrices are compile-time constants,
    # hoisted out of the kernel — review item 6)
    g = (jnp.arange(D)[:, None] // DH == jnp.arange(H)[None, :]).astype(jnp.float32)
    const = jnp.zeros((SLAB_R, LANES), jnp.float32)
    const = const.at[ROW_WFC:ROW_WFC + D, 0:CP].set(params["fc_w"].T)
    const = const.at[ROW_G:ROW_G + D, 0:H].set(g)
    const = const.at[ROW_GT:ROW_GT + H, 0:D].set(g.T)
    const = const.at[ROW_GAMMA, 0:H].set(params["ln_g"])
    const = const.at[ROW_BETA, 0:H].set(params["ln_b"])
    const = const.at[ROW_BIAS, 0:CP].set(params["fc_b"])

    out = pl.pallas_call(
        attention_tfidf_kernel,
        out_shape=jax.ShapeDtypeStruct((B, OUT_R, LANES), jnp.float32),
        grid=(B,),
        in_specs=[
            pl.BlockSpec((1, DATA_R, LANES), lambda b: (b, 0, 0)),
            pl.BlockSpec((SLAB_R, LANES), lambda b: (0, 0)),     # fetched once
        ],
        out_specs=pl.BlockSpec((1, OUT_R, LANES), lambda b: (b, 0, 0)),
        compiler_params=pltpu.CompilerParams(
            dimension_semantics=("parallel",)),                  # both TCs on v7x
    )(data, const)

    return {"t_probs": out[:, 0:L, 0:CP], "logits": out[:, L, 0:C]}
    # TODO(synk): FocalLoss branch (labels is not None) omitted — inference path only.


# ------------------------- pure-JAX reference check -------------------------
def reference_forward(params, doc_tids, TFs, DFs):
    HI = jax.lax.Precision.HIGHEST
    K, Q, V, mask, doc_sizes, bx_packed, pad = embedding_tfidf(params, doc_tids, TFs, DFs)
    sh = lambda x: x.reshape(B, L, H, DH).transpose(0, 2, 1, 3)
    Kh, Qh, Vh = sh(K), sh(Q), sh(V)
    diff = Kh[:, :, :, None, :] - Qh[:, :, None, :, :]           # (B, H, Li, Lj, DH)
    co = jnp.sqrt(jnp.sum(diff * diff, axis=-1))                 # torch.cdist semantics
    mu = jnp.mean(co, axis=1, keepdims=True)
    var = jnp.mean((co - mu) ** 2, axis=1, keepdims=True)
    co = (co - mu) * jax.lax.rsqrt(var + LN_EPS)
    co = co * params["ln_g"][None, :, None, None] + params["ln_b"][None, :, None, None]
    co = jnp.where(mask[:, None] > 0.5, co, 0.0)
    att = jax.nn.softmax(co, axis=-1)
    att = jnp.where(jnp.isnan(att), 0.0, att)
    ctx = jnp.einsum("bhij,bhjd->bhid", att, Vh, precision=HI)
    x = ctx.transpose(0, 2, 1, 3).reshape(B, L, D)
    lg = jnp.einsum("bld,cd->blc", x, params["fc_w"], precision=HI) + params["fc_b"]
    t_probs = jax.nn.softmax(lg, axis=-1)
    w = att.sum(axis=-2).mean(axis=1) / doc_sizes[:, None]
    w = jnp.where(~pad, -jnp.inf, w)
    w = jax.nn.softmax(w, axis=-1)
    w = jnp.where(jnp.isnan(w), 0.0, w)
    full = jnp.sum(t_probs * w[..., None], axis=-2)
    logits = jax.nn.softmax(full[:, :C], axis=-1)
    return t_probs, logits


# ----------------------------------- main -----------------------------------
if __name__ == "__main__":
    key = jax.random.PRNGKey(0)
    k_emb, k_w, k_b, k_tid, k_tf, k_df = jax.random.split(key, 6)
    params = {
        "emb": 0.1 * jax.random.normal(k_emb, (VOCAB, 3 * D), jnp.float32),
        # xavier_normal_ for fc[0].weight; default Linear bias init (uniform)
        "fc_w": math.sqrt(2.0 / (D + CP)) * jax.random.normal(k_w, (CP, D), jnp.float32),
        "fc_b": (1.0 / math.sqrt(D)) * (2.0 * jax.random.uniform(k_b, (CP,)) - 1.0),
        "ln_g": jnp.ones((H,), jnp.float32),     # LayerNorm default affine init
        "ln_b": jnp.zeros((H,), jnp.float32),
    }

    doc_tids = jax.random.randint(k_tid, (B, L), 1, VOCAB, dtype=jnp.int32)
    doc_tids = doc_tids.at[1, L - 2:].set(0)     # padding tokens in second document
    TFs = jax.random.randint(k_tf, (B, L), 1, MAXF + 1, dtype=jnp.int32)
    DFs = jax.random.randint(k_df, (B, L), 1, 11, dtype=jnp.int32)

    out = attention_tfidf_forward(params, doc_tids, TFs, DFs)
    jax.block_until_ready(out)

    ref_t, ref_l = reference_forward(params, doc_tids, TFs, DFs)
    assert out["t_probs"].shape == (B, L, CP) and out["logits"].shape == (B, C)
    assert jnp.allclose(out["t_probs"], ref_t, atol=1e-3, rtol=1e-3), "t_probs mismatch"
    assert jnp.allclose(out["logits"], ref_l, atol=1e-3, rtol=1e-3), "logits mismatch"
    print("KERNEL_OK")
</pallas_src>

<mosaic_0001>
module attributes {stable_mosaic.version = 11 : i64} {
  func.func @attention_tfidf_kernel(%arg0: i32, %arg1: memref<1x32x128xf32, #tpu.memory_space<vmem>>, %arg2: memref<112x128xf32, #tpu.memory_space<vmem>>, %arg3: memref<1x16x128xf32, #tpu.memory_space<vmem>>) attributes {dimension_semantics = [#tpu.dimension_semantics<parallel>], iteration_bounds = array<i64: 2>, scalar_prefetch = 0 : i64, scratch_operands = 0 : i64, tpu.core_type = #tpu.core_type<tc>, window_params = [{transform_indices = @transform_0, window_bounds = array<i64: 1, 32, 128>}, {pipeline_mode = #tpu.pipeline_mode<synchronous>, transform_indices = @transform_1, window_bounds = array<i64: 112, 128>}, {transform_indices = @transform_2, window_bounds = array<i64: 1, 16, 128>}]} {
    %c0 = arith.constant 0 : index
    %c0_0 = arith.constant 0 : index
    %c0_1 = arith.constant 0 : index
    %0 = vector.load %arg1[%c0, %c0_0, %c0_1] : memref<1x32x128xf32, #tpu.memory_space<vmem>>, vector<1x32x128xf32>
    %1 = vector.shape_cast %0 : vector<1x32x128xf32> to vector<32x128xf32>
    %2 = vector.extract_strided_slice %1 {offsets = [0, 0], sizes = [8, 48], strides = [1, 1]} : vector<32x128xf32> to vector<8x48xf32>
    %3 = vector.extract_strided_slice %1 {offsets = [8, 0], sizes = [8, 48], strides = [1, 1]} : vector<32x128xf32> to vector<8x48xf32>
    %4 = vector.extract_strided_slice %1 {offsets = [16, 0], sizes = [8, 48], strides = [1, 1]} : vector<32x128xf32> to vector<8x48xf32>
    %5 = vector.extract_strided_slice %1 {offsets = [24, 0], sizes = [8, 8], strides = [1, 1]} : vector<32x128xf32> to vector<8x8xf32>
    %6 = vector.extract_strided_slice %1 {offsets = [24, 8], sizes = [8, 1], strides = [1, 1]} : vector<32x128xf32> to vector<8x1xf32>
    %7 = vector.extract_strided_slice %1 {offsets = [24, 9], sizes = [8, 1], strides = [1, 1]} : vector<32x128xf32> to vector<8x1xf32>
    %c0_2 = arith.constant 0 : index
    %c0_3 = arith.constant 0 : index
    %8 = vector.load %arg2[%c0_2, %c0_3] : memref<112x128xf32, #tpu.memory_space<vmem>>, vector<48x6xf32>
    %c48 = arith.constant 48 : index
    %c0_4 = arith.constant 0 : index
    %9 = vector.load %arg2[%c48, %c0_4] : memref<112x128xf32, #tpu.memory_space<vmem>>, vector<48x6xf32>
    %c96 = arith.constant 96 : index
    %c0_5 = arith.constant 0 : index
    %10 = vector.load %arg2[%c96, %c0_5] : memref<112x128xf32, #tpu.memory_space<vmem>>, vector<6x48xf32>
    %c102 = arith.constant 102 : index
    %c0_6 = arith.constant 0 : index
    %11 = vector.load %arg2[%c102, %c0_6] : memref<112x128xf32, #tpu.memory_space<vmem>>, vector<1x6xf32>
    %c103 = arith.constant 103 : index
    %c0_7 = arith.constant 0 : index
    %12 = vector.load %arg2[%c103, %c0_7] : memref<112x128xf32, #tpu.memory_space<vmem>>, vector<1x6xf32>
    %c104 = arith.constant 104 : index
    %c0_8 = arith.constant 0 : index
    %13 = vector.load %arg2[%c104, %c0_8] : memref<112x128xf32, #tpu.memory_space<vmem>>, vector<1x6xf32>
    %14 = vector.shape_cast %2 : vector<8x48xf32> to vector<8x1x48xf32>
    %15 = vector.shape_cast %3 : vector<8x48xf32> to vector<1x8x48xf32>
    %16 = vector.broadcast %14 : vector<8x1x48xf32> to vector<8x8x48xf32>
    %17 = vector.broadcast %15 : vector<1x8x48xf32> to vector<8x8x48xf32>
    %18 = arith.subf %16, %17 : vector<8x8x48xf32>
    %19 = arith.mulf %18, %18 : vector<8x8x48xf32>
    %20 = vector.shape_cast %19 : vector<8x8x48xf32> to vector<64x48xf32>
    %cst = arith.constant dense<0.000000e+00> : vector<64x6xf32>
    %21 = tpu.matmul %20, %9, %cst {dimension_numbers = #tpu.dot_dimension_numbers<[1], [0], [0], [1], [0, 0, 1, 1], [], []>} : vector<64x48xf32>, vector<48x6xf32>, vector<64x6xf32> -> vector<64x6xf32>
    %22 = math.sqrt %21 : vector<64x6xf32>
    %23 = vector.shape_cast %22 : vector<64x6xf32> to vector<8x8x6xf32>
    %cst_9 = arith.constant dense<0.000000e+00> : vector<8x8xf32>
    %24 = vector.multi_reduction <add>, %23, %cst_9 [2] : vector<8x8x6xf32> to vector<8x8xf32>
    %25 = vector.shape_cast %24 : vector<8x8xf32> to vector<8x8x1xf32>
    %cst_10 = arith.constant 6.000000e+00 : f32
    %26 = vector.broadcast %cst_10 : f32 to vector<8x8x1xf32>
    %27 = arith.divf %25, %26 : vector<8x8x1xf32>
    %28 = vector.broadcast %27 : vector<8x8x1xf32> to vector<8x8x6xf32>
    %29 = arith.subf %23, %28 : vector<8x8x6xf32>
    %30 = arith.mulf %29, %29 : vector<8x8x6xf32>
    %cst_11 = arith.constant dense<0.000000e+00> : vector<8x8xf32>
    %31 = vector.multi_reduction <add>, %30, %cst_11 [2] : vector<8x8x6xf32> to vector<8x8xf32>
    %32 = vector.shape_cast %31 : vector<8x8xf32> to vector<8x8x1xf32>
    %cst_12 = arith.constant 6.000000e+00 : f32
    %33 = vector.broadcast %cst_12 : f32 to vector<8x8x1xf32>
    %34 = arith.divf %32, %33 : vector<8x8x1xf32>
    %35 = vector.broadcast %27 : vector<8x8x1xf32> to vector<8x8x6xf32>
    %36 = arith.subf %23, %35 : vector<8x8x6xf32>
    %cst_13 = arith.constant 9.99999974E-6 : f32
    %37 = vector.broadcast %cst_13 : f32 to vector<8x8x1xf32>
    %38 = arith.addf %34, %37 : vector<8x8x1xf32>
    %39 = math.rsqrt %38 : vector<8x8x1xf32>
    %40 = vector.broadcast %39 : vector<8x8x1xf32> to vector<8x8x6xf32>
    %41 = arith.mulf %36, %40 : vector<8x8x6xf32>
    %42 = vector.shape_cast %11 : vector<1x6xf32> to vector<1x1x6xf32>
    %43 = vector.broadcast %42 : vector<1x1x6xf32> to vector<8x8x6xf32>
    %44 = arith.mulf %41, %43 : vector<8x8x6xf32>
    %45 = vector.shape_cast %12 : vector<1x6xf32> to vector<1x1x6xf32>
    %46 = vector.broadcast %45 : vector<1x1x6xf32> to vector<8x8x6xf32>
    %47 = arith.addf %44, %46 : vector<8x8x6xf32>
    %48 = vector.shape_cast %5 : vector<8x8xf32> to vector<8x8x1xf32>
    %cst_14 = arith.constant 5.000000e-01 : f32
    %49 = vector.broadcast %cst_14 : f32 to vector<8x8x1xf32>
    %50 = arith.cmpf ogt, %48, %49 : vector<8x8x1xf32>
    %cst_15 = arith.constant 0.000000e+00 : f32
    %51 = vector.shape_cast %50 : vector<8x8x1xi1> to vector<8x8x1xi1>
    %52 = vector.broadcast %51 : vector<8x8x1xi1> to vector<8x8x6xi1>
    %53 = vector.broadcast %cst_15 : f32 to vector<8x8x6xf32>
    %54 = arith.select %52, %47, %53 : vector<8x8x6xi1>, vector<8x8x6xf32>
    %cst_16 = arith.constant dense<0xFF800000> : vector<8x6xf32>
    %55 = vector.multi_reduction <maximumf>, %54, %cst_16 [1] : vector<8x8x6xf32> to vector<8x6xf32>
    %56 = vector.shape_cast %55 : vector<8x6xf32> to vector<8x1x6xf32>
    %57 = vector.broadcast %56 : vector<8x1x6xf32> to vector<8x8x6xf32>
    %58 = arith.subf %54, %57 : vector<8x8x6xf32>
    %59 = math.exp %58 : vector<8x8x6xf32>
    %cst_17 = arith.constant dense<0.000000e+00> : vector<8x6xf32>
    %60 = vector.multi_reduction <add>, %59, %cst_17 [1] : vector<8x8x6xf32> to vector<8x6xf32>
    %61 = vector.shape_cast %60 : vector<8x6xf32> to vector<8x1x6xf32>
    %62 = vector.broadcast %61 : vector<8x1x6xf32> to vector<8x8x6xf32>
    %63 = arith.divf %59, %62 : vector<8x8x6xf32>
    %64 = vector.shape_cast %63 : vector<8x8x6xf32> to vector<64x6xf32>
    %cst_18 = arith.constant dense<0.000000e+00> : vector<64x48xf32>
    %65 = tpu.matmul %64, %10, %cst_18 {dimension_numbers = #tpu.dot_dimension_numbers<[1], [0], [0], [1], [0, 0, 1, 1], [], []>} : vector<64x6xf32>, vector<6x48xf32>, vector<64x48xf32> -> vector<64x48xf32>
    %66 = vector.shape_cast %65 : vector<64x48xf32> to vector<8x8x48xf32>
    %67 = vector.shape_cast %4 : vector<8x48xf32> to vector<1x8x48xf32>
    %68 = vector.broadcast %67 : vector<1x8x48xf32> to vector<8x8x48xf32>
    %69 = arith.mulf %66, %68 : vector<8x8x48xf32>
    %cst_19 = arith.constant dense<0.000000e+00> : vector<8x48xf32>
    %70 = vector.multi_reduction <add>, %69, %cst_19 [1] : vector<8x8x48xf32> to vector<8x48xf32>
    %cst_20 = arith.constant dense<0.000000e+00> : vector<8x6xf32>
    %71 = tpu.matmul %70, %8, %cst_20 {dimension_numbers = #tpu.dot_dimension_numbers<[1], [0], [0], [1], [0, 0, 1, 1], [], []>} : vector<8x48xf32>, vector<48x6xf32>, vector<8x6xf32> -> vector<8x6xf32>
    %72 = vector.broadcast %13 : vector<1x6xf32> to vector<8x6xf32>
    %73 = arith.addf %71, %72 : vector<8x6xf32>
    %cst_21 = arith.constant dense<0xFF800000> : vector<8xf32>
    %74 = vector.multi_reduction <maximumf>, %73, %cst_21 [1] : vector<8x6xf32> to vector<8xf32>
    %75 = vector.shape_cast %74 : vector<8xf32> to vector<8x1xf32>
    %76 = vector.broadcast %75 : vector<8x1xf32> to vector<8x6xf32>
    %77 = arith.subf %73, %76 : vector<8x6xf32>
    %78 = math.exp %77 : vector<8x6xf32>
    %cst_22 = arith.constant dense<0.000000e+00> : vector<8xf32>
    %79 = vector.multi_reduction <add>, %78, %cst_22 [1] : vector<8x6xf32> to vector<8xf32>
    %80 = vector.shape_cast %79 : vector<8xf32> to vector<8x1xf32>
    %81 = vector.broadcast %80 : vector<8x1xf32> to vector<8x6xf32>
    %82 = arith.divf %78, %81 : vector<8x6xf32>
    %cst_23 = arith.constant dense<0.000000e+00> : vector<8x6xf32>
    %83 = vector.multi_reduction <add>, %63, %cst_23 [0] : vector<8x8x6xf32> to vector<8x6xf32>
    %cst_24 = arith.constant dense<0.000000e+00> : vector<8xf32>
    %84 = vector.multi_reduction <add>, %83, %cst_24 [1] : vector<8x6xf32> to vector<8xf32>
    %85 = vector.shape_cast %84 : vector<8xf32> to vector<8x1xf32>
    %cst_25 = arith.constant 6.000000e+00 : f32
    %86 = vector.broadcast %cst_25 : f32 to vector<8x1xf32>
    %87 = arith.divf %85, %86 : vector<8x1xf32>
    %88 = arith.mulf %87, %6 : vector<8x1xf32>
    %89 = arith.addf %88, %7 : vector<8x1xf32>
    %cst_26 = arith.constant dense<0xFF800000> : vector<1xf32>
    %90 = vector.multi_reduction <maximumf>, %89, %cst_26 [0] : vector<8x1xf32> to vector<1xf32>
    %91 = vector.shape_cast %90 : vector<1xf32> to vector<1x1xf32>
    %92 = vector.broadcast %91 : vector<1x1xf32> to vector<8x1xf32>
    %93 = arith.subf %89, %92 : vector<8x1xf32>
    %94 = math.exp %93 : vector<8x1xf32>
    %cst_27 = arith.constant dense<0.000000e+00> : vector<1xf32>
    %95 = vector.multi_reduction <add>, %94, %cst_27 [0] : vector<8x1xf32> to vector<1xf32>
    %96 = vector.shape_cast %95 : vector<1xf32> to vector<1x1xf32>
    %97 = vector.broadcast %96 : vector<1x1xf32> to vector<8x1xf32>
    %98 = arith.divf %94, %97 : vector<8x1xf32>
    %99 = arith.cmpf one, %98, %98 : vector<8x1xf32>
    %cst_28 = arith.constant 0.000000e+00 : f32
    %100 = vector.broadcast %cst_28 : f32 to vector<8x1xf32>
    %101 = arith.select %99, %100, %98 : vector<8x1xi1>, vector<8x1xf32>
    %102 = vector.broadcast %101 : vector<8x1xf32> to vector<8x6xf32>
    %103 = arith.mulf %82, %102 : vector<8x6xf32>
    %cst_29 = arith.constant dense<0.000000e+00> : vector<6xf32>
    %104 = vector.multi_reduction <add>, %103, %cst_29 [0] : vector<8x6xf32> to vector<6xf32>
    %105 = vector.shape_cast %104 : vector<6xf32> to vector<1x6xf32>
    %106 = vector.extract_strided_slice %105 {offsets = [0, 0], sizes = [1, 4], strides = [1, 1]} : vector<1x6xf32> to vector<1x4xf32>
    %cst_30 = arith.constant dense<0xFF800000> : vector<1xf32>
    %107 = vector.multi_reduction <maximumf>, %106, %cst_30 [1] : vector<1x4xf32> to vector<1xf32>
    %108 = vector.shape_cast %107 : vector<1xf32> to vector<1x1xf32>
    %109 = vector.broadcast %108 : vector<1x1xf32> to vector<1x4xf32>
    %110 = arith.subf %106, %109 : vector<1x4xf32>
    %111 = math.exp %110 : vector<1x4xf32>
    %cst_31 = arith.constant dense<0.000000e+00> : vector<1xf32>
    %112 = vector.multi_reduction <add>, %111, %cst_31 [1] : vector<1x4xf32> to vector<1xf32>
    %113 = vector.shape_cast %112 : vector<1xf32> to vector<1x1xf32>
    %114 = vector.broadcast %113 : vector<1x1xf32> to vector<1x4xf32>
    %115 = arith.divf %111, %114 : vector<1x4xf32>
    %cst_32 = arith.constant 0.000000e+00 : f32
    %116 = vector.broadcast %cst_32 : f32 to vector<8x122xf32>
    %117 = tpu.concatenate %82, %116 in 1 : vector<8x6xf32>, vector<8x122xf32> -> vector<8x128xf32>
    %118 = vector.shape_cast %115 : vector<1x4xf32> to vector<1x4xf32>
    %119 = vector.broadcast %118 : vector<1x4xf32> to vector<8x4xf32>
    %cst_33 = arith.constant 0.000000e+00 : f32
    %120 = vector.broadcast %cst_33 : f32 to vector<8x124xf32>
    %121 = tpu.concatenate %119, %120 in 1 : vector<8x4xf32>, vector<8x124xf32> -> vector<8x128xf32>
    %122 = tpu.concatenate %117, %121 in 0 : vector<8x128xf32>, vector<8x128xf32> -> vector<16x128xf32>
    %123 = vector.shape_cast %122 : vector<16x128xf32> to vector<1x16x128xf32>
    %c0_34 = arith.constant 0 : index
    %c0_35 = arith.constant 0 : index
    %c0_36 = arith.constant 0 : index
    %124 = vector.load %arg3[%c0_34, %c0_35, %c0_36] : memref<1x16x128xf32, #tpu.memory_space<vmem>>, vector<1x16x128xf32>
    tpu.vector_store %arg3[%c0_34, %c0_35, %c0_36], %123 {strides = array<i32>} : memref<1x16x128xf32, #tpu.memory_space<vmem>>, vector<1x16x128xf32>,
    return
  }
  func.func @transform_0(%arg0: i32) -> (i32, i32, i32) {
    %c0_i32 = arith.constant 0 : i32
    %c0_i32_0 = arith.constant 0 : i32
    %c0_i32_1 = arith.constant 0 : i32
    return %arg0, %c0_i32, %c0_i32_0 : i32, i32, i32
  }
  func.func @transform_1(%arg0: i32) -> (i32, i32) {
    %c0_i32 = arith.constant 0 : i32
    %c0_i32_0 = arith.constant 0 : i32
    %c0_i32_1 = arith.constant 0 : i32
    return %c0_i32, %c0_i32_0 : i32, i32
  }
  func.func @transform_2(%arg0: i32) -> (i32, i32, i32) {
    %c0_i32 = arith.constant 0 : i32
    %c0_i32_0 = arith.constant 0 : i32
    %c0_i32_1 = arith.constant 0 : i32
    return %arg0, %c0_i32, %c0_i32_0 : i32, i32, i32
  }
}

</mosaic_0001>

<llo_original>
// kernel: attention_tfidf_forward.1
$region0: #{attention_tfidf_forward.1}
  #allocation0 [shape = 'u32[]', space=smem, size = 0x4, offset = 0x4, fixed_abs, tag = 'smem constant byte address 0x4 - core index']
  #allocation1 [shape = 'u32[144,128]{1,0:T(1,128)}', space=vmem, size = 0x12000, scoped, tag = 'internal scratch']
  %s0 = inlined_call_operand.vmem [shape: f32[2,32,128], index: 0, kind: input, shape index: {}]
  %s1 = inlined_call_operand.vmem [shape: f32[112,128], index: 1, kind: input, shape index: {}]
  %s2 = inlined_call_operand.vmem [shape: f32[2,16,128], index: 2, kind: output, shape index: {}]
  %s3 = sld [smem:[#allocation0]]
  $region41: #{attention_tfidf_forward.1} parent=0
    _
  %s5 = ssub.s32 1, %s3
  %s6 = scalar_select 0, %s5, %s3
  loop: start=0, step=1, limit=4
  $region2: #{attention_tfidf_forward.1} parent=0 // loop_pre_header
    _
  $region3: #{attention_tfidf_forward.1} parent=0 // loop_header
    %s8 = sphi 0, %s12
    %p9 = scmp.ge.s32.totalorder %s8, 4
    %s18 = sphi 0, %s20
    %s21 = sphi 0, %s18
    %s22 = sphi 0, %s21
    %s38 = sphi 0, %s22
    %s42 = sphi 0, %s42
    %s44 = sphi 0, %s42
    %s45 = sphi 0, %s44
    %s59 = sphi 0, %s45
    %s65 = sphi 0, %s67
    %s68 = sphi 0, %s65
    %s69 = sphi 0, %s68
    %s85 = sphi 0, %s69
  $region4: #{attention_tfidf_forward.1} parent=0 // loop_header_branch
    %11 = sbr.rel (%p9) target = $region8
  $region5: #{attention_tfidf_forward.1} parent=0 // loop_body
    %s13 = ssub.s32 %s8, 1
    %s14 = ssub.s32 %s8, 2
    %s15 = sadd.s32 %s8, 1
    %s16 = ssub.s32 %s8, %s15
    %p17 = scmp.eq.s32.totalorder %s16, 0
    %s19 = sadd.s32 %s18, 1
    %s20 = scalar_select %p17, %s18, %s19
    %p23 = pneg %p17
    %p24 = scmp.eq.s32.totalorder %s8, 1
    %p25 = por %p23, %p24
    %p26 = scmp.ne.s32.totalorder %s18, %s21
    %p27 = scmp.eq.s32.totalorder %s8, 0
    %p28 = por %p26, %p27
    %p29 = scmp.ne.s32.totalorder %s18, %s21
    %p30 = scmp.eq.s32.totalorder %s13, 1
    %p31 = por %p29, %p30
    %p32 = scmp.ne.s32.totalorder %s21, %s22
    %p33 = scmp.eq.s32.totalorder %s13, 0
    %p34 = por %p32, %p33
    %p35 = scmp.ne.s32.totalorder %s21, %s22
    %p36 = scmp.eq.s32.totalorder %s14, 1
    %p37 = por %p35, %p36
    %p39 = scmp.ne.s32.totalorder %s22, %s38
    %p40 = scmp.eq.s32.totalorder %s14, 0
    %p41 = por %p39, %p40
    %s43 = sadd.s32 %s42, 1
    %p46 = scmp.eq.s32.totalorder %s8, 1
    %p47 = scmp.ne.s32.totalorder %s42, %s44
    %p48 = scmp.eq.s32.totalorder %s8, 0
    %p49 = por %p47, %p48
    %p50 = scmp.ne.s32.totalorder %s42, %s44
    %p51 = scmp.eq.s32.totalorder %s13, 1
    %p52 = por %p50, %p51
    %p53 = scmp.ne.s32.totalorder %s44, %s45
    %p54 = scmp.eq.s32.totalorder %s13, 0
    %p55 = por %p53, %p54
    %p56 = scmp.ne.s32.totalorder %s44, %s45
    %p57 = scmp.eq.s32.totalorder %s14, 1
    %p58 = por %p56, %p57
    %p60 = scmp.ne.s32.totalorder %s45, %s59
    %p61 = scmp.eq.s32.totalorder %s14, 0
    %p62 = por %p60, %p61
    %s63 = ssub.s32 %s8, %s15
    %p64 = scmp.eq.s32.totalorder %s63, 0
    %s66 = sadd.s32 %s65, 1
    %s67 = scalar_select %p64, %s65, %s66
    %p70 = pneg %p64
    %p71 = scmp.eq.s32.totalorder %s8, 1
    %p72 = por %p70, %p71
    %p73 = scmp.ne.s32.totalorder %s65, %s68
    %p74 = scmp.eq.s32.totalorder %s8, 0
    %p75 = por %p73, %p74
    %p76 = scmp.ne.s32.totalorder %s65, %s68
    %p77 = scmp.eq.s32.totalorder %s13, 1
    %p78 = por %p76, %p77
    %p79 = scmp.ne.s32.totalorder %s68, %s69
    %p80 = scmp.eq.s32.totalorder %s13, 0
    %p81 = por %p79, %p80
    %p82 = scmp.ne.s32.totalorder %s68, %s69
    %p83 = scmp.eq.s32.totalorder %s14, 1
    %p84 = por %p82, %p83
    %p86 = scmp.ne.s32.totalorder %s69, %s85
    %p87 = scmp.eq.s32.totalorder %s14, 0
    %p88 = por %p86, %p87
    %p89 = scmp.le.s32.totalorder 1, %s8
    %p90 = scmp.lt.s32.totalorder %s8, 3
    %p91 = pnand %p89, %p90
    %p92 = pneg %p91
    // Predicated region
    $region9: #{attention_tfidf_forward.1} parent=5 // pred_check
      _
    $region10: #{attention_tfidf_forward.1} parent=5 // pred_check_branch
      %94 = sbr.rel (%p91) target = $region12
    $region11: #{attention_tfidf_forward.1} parent=5 // pred_region
      %s95 = ssub.s32 %s8, 1
      // Predicated region
      $region13: #{attention_tfidf_forward.1} parent=11 // pred_check
        %p96 = pneg %p55
      $region14: #{attention_tfidf_forward.1} parent=11 // pred_check_branch
        %98 = sbr.rel (%p96) target = $region16
      $region15: #{attention_tfidf_forward.1} parent=11 // pred_region
        _
      $region16: #{attention_tfidf_forward.1} parent=11 // pred_fallthru
        _
    $region12: #{attention_tfidf_forward.1} parent=5 // pred_fallthru
      _
    %p99 = scmp.lt.s32.totalorder %s8, 2
    // Predicated region
    $region17: #{attention_tfidf_forward.1} parent=5 // pred_check
      %p100 = pneg %p99
    $region18: #{attention_tfidf_forward.1} parent=5 // pred_check_branch
      %102 = sbr.rel (%p100) target = $region20
    $region19: #{attention_tfidf_forward.1} parent=5 // pred_region
      // Predicated region
      $region21: #{attention_tfidf_forward.1} parent=19 // pred_check
        %p103 = pneg %p28
      $region22: #{attention_tfidf_forward.1} parent=19 // pred_check_branch
        %105 = sbr.rel (%p103) target = $region24
      $region23: #{attention_tfidf_forward.1} parent=19 // pred_region
        %p106 = scmp.lt.s32.totalorder %s8, 1
        %s107 = scalar_select %p106, %s8, 1
        %s108 = smul.addr %s107, 4
        %s109 = smul.addr %s108, 8
        %s110 = scalar_lea.vmem %s0, %s109
      $region24: #{attention_tfidf_forward.1} parent=19 // pred_fallthru
        _
    $region20: #{attention_tfidf_forward.1} parent=5 // pred_fallthru
      _
    %p111 = scmp.le.s32.totalorder 1, %s8
    %p112 = scmp.lt.s32.totalorder %s8, 3
    %p113 = pnand %p111, %p112
    %p114 = pneg %p113
    // Predicated region
    $region25: #{attention_tfidf_forward.1} parent=5 // pred_check
      _
    $region26: #{attention_tfidf_forward.1} parent=5 // pred_check_branch
      %116 = sbr.rel (%p113) target = $region28
    $region27: #{attention_tfidf_forward.1} parent=5 // pred_region
      %s117 = ssub.s32 %s8, 1
      %p118 = scmp.lt.s32.totalorder %s13, 1
      %s119 = scalar_select %p118, %s13, 1
      %s120 = smul.addr %s119, 4
      %s121 = smul.addr %s120, 8
      %s122 = scalar_lea.vmem %s0, %s121
      %p123 = pneg %p34
      %p124 = pneg %p31
      %p125 = pneg %p55
      %p126 = pneg %p52
      %p127 = pneg %p81
      %p128 = pneg %p78
      %p129 = scmp.lt.s32.totalorder %s13, 1
      %s130 = scalar_select %p129, %s13, 1
      %s131 = smul.addr %s130, 2
      %s132 = smul.addr %s131, 8
      %s133 = scalar_lea.vmem %s2, %s132
      %p134 = scmp.lt.s32.totalorder %s13, 1
      %s135 = scalar_select %p134, %s13, 1
      %s136 = smul.addr %s135, 4
      %s137 = smul.addr %s136, 8
      %s138 = scalar_lea.vmem %s0, %s137
      %p139 = scmp.lt.s32.totalorder %s13, 1
      %s140 = scalar_select %p139, %s13, 1
      %s141 = smul.addr %s140, 2
      %s142 = smul.addr %s141, 8
      %s143 = scalar_lea.vmem %s2, %s142
      %v144 = vld [vmem:[%s138] sm:$0xff]
      %v145 = vld [vmem:[%s138 + $0x8] sm:$0xff]
      %v146 = vld [vmem:[%s138 + $0x10] sm:$0xff]
      %v147 = vld [vmem:[%s138 + $0x18] sm:$0xff]
      %v148 = vld [vmem:[%s1] sm:$0xff]
      %v149 = vld [vmem:[%s1 + $0x8] sm:$0xff]
      %v150 = vld [vmem:[%s1 + $0x10] sm:$0xff]
      %v151 = vld [vmem:[%s1 + $0x18] sm:$0xff]
      %v152 = vld [vmem:[%s1 + $0x20] sm:$0xff]
      %v153 = vld [vmem:[%s1 + $0x28] sm:$0xff]
      %v154 = vld [vmem:[%s1 + $0x30] sm:$0xff]
      %v155 = vld [vmem:[%s1 + $0x38] sm:$0xff]
      %v156 = vld [vmem:[%s1 + $0x40] sm:$0xff]
      %v157 = vld [vmem:[%s1 + $0x48] sm:$0xff]
      %v158 = vld [vmem:[%s1 + $0x50] sm:$0xff]
      %v159 = vld [vmem:[%s1 + $0x58] sm:$0xff]
      %v160 = vld [vmem:[%s1 + $0x60] sm:$0x3f]
      %v161 = vld [vmem:[%s1 + $0x66] sm:$0x1]
      %v162 = vld [vmem:[%s1 + $0x67] sm:$0x1]
      %v163 = vld [vmem:[%s1 + $0x68] sm:$0x1]
      %v165 = vcombine.high %v144, %v144
      %v167 = vunpack.c.l.s4 1966171168
      %v168 = vunpack.c.0.s8 %v167
      %v169 = vlaneseq
      %v170 = vshrl.u32 %v169, 7
      %v171 = vsub.s32 %v168, %v170
      %v172 = vrot.slane %v144, %v171
      %v174 = vunpack.c.l.s4 1966171168
      %v175 = vunpack.c.0.s8 %v174
      %v176 = vlaneseq
      %v177 = vshrl.u32 %v176, 7
      %v178 = vsub.s32 %v175, %v177
      %v179 = vrot.slane %v165, %v178
      %v180 = vcombine.high %v172, %v172
      %v181 = vcombine.high %v179, %v179
      %v183 = vunpack.c.l.s4 1966171168
      %v184 = vunpack.c.0.s8 %v183
      %v185 = vlaneseq
      %v186 = vshrl.u32 %v185, 7
      %v187 = vsub.s32 %v184, %v186
      %v188 = vrot.slane %v172, %v187
      %v190 = vunpack.c.l.s4 1966171168
      %v191 = vunpack.c.0.s8 %v190
      %v192 = vlaneseq
      %v193 = vshrl.u32 %v192, 7
      %v194 = vsub.s32 %v191, %v193
      %v195 = vrot.slane %v179, %v194
      %v197 = vunpack.c.l.s4 1966171168
      %v198 = vunpack.c.0.s8 %v197
      %v199 = vlaneseq
      %v200 = vshrl.u32 %v199, 7
      %v201 = vsub.s32 %v198, %v200
      %v202 = vrot.slane %v180, %v201
      %v204 = vunpack.c.l.s4 1966171168
      %v205 = vunpack.c.0.s8 %v204
      %v206 = vlaneseq
      %v207 = vshrl.u32 %v206, 7
      %v208 = vsub.s32 %v205, %v207
      %v209 = vrot.slane %v181, %v208
      %v210 = vcombine.high %v188, %v188
      %v211 = vcombine.high %v195, %v195
      %v212 = vcombine.high %v202, %v202
      %v213 = vcombine.high %v209, %v209
      %v214 = vlaneseq
      %v215 = vshrl.u32 %v214, 7
      %v216 = vsub.s32 0, %v215
      %v217 = vrot.slane %v188, %v216
      %v218 = vlaneseq
      %v219 = vshrl.u32 %v218, 7
      %v220 = vsub.s32 0, %v219
      %v221 = vrot.slane %v202, %v220
      %v222 = vlaneseq
      %v223 = vshrl.u32 %v222, 7
      %v224 = vsub.s32 0, %v223
      %v225 = vrot.slane %v210, %v224
      %v226 = vlaneseq
      %v227 = vshrl.u32 %v226, 7
      %v228 = vsub.s32 0, %v227
      %v229 = vrot.slane %v212, %v228
      %v230 = vlaneseq
      %v231 = vshrl.u32 %v230, 7
      %v232 = vsub.s32 0, %v231
      %v233 = vrot.slane %v195, %v232
      %v234 = vlaneseq
      %v235 = vshrl.u32 %v234, 7
      %v236 = vsub.s32 0, %v235
      %v237 = vrot.slane %v209, %v236
      %v238 = vlaneseq
      %v239 = vshrl.u32 %v238, 7
      %v240 = vsub.s32 0, %v239
      %v241 = vrot.slane %v211, %v240
      %v242 = vlaneseq
      %v243 = vshrl.u32 %v242, 7
      %v244 = vsub.s32 0, %v243
      %v245 = vrot.slane %v213, %v244
      %v254 = vsub.f32 %v217, %v145
      %v255 = vsub.f32 %v221, %v145
      %v256 = vsub.f32 %v225, %v145
      %v257 = vsub.f32 %v229, %v145
      %v258 = vsub.f32 %v233, %v145
      %v259 = vsub.f32 %v237, %v145
      %v260 = vsub.f32 %v241, %v145
      %v261 = vsub.f32 %v245, %v145
      %v262 = vmul.f32 %v254, %v254
      %v263 = vmul.f32 %v255, %v255
      %v264 = vmul.f32 %v256, %v256
      %v265 = vmul.f32 %v257, %v257
      %v266 = vmul.f32 %v258, %v258
      %v267 = vmul.f32 %v259, %v259
      %v268 = vmul.f32 %v260, %v260
      %v269 = vmul.f32 %v261, %v261
      %vm270 = vcmask 392192
      %v272 = vsel %vm270, %v262, 0
      %v275 = vsel %vm270, %v263, 0
      %v278 = vsel %vm270, %v264, 0
      %v281 = vsel %vm270, %v265, 0
      %v284 = vsel %vm270, %v266, 0
      %v287 = vsel %vm270, %v267, 0
      %v290 = vsel %vm270, %v268, 0
      %v293 = vsel %vm270, %v269, 0
      %295 = vmatprep.subr.mxu0 0.0
      %296 = vmatpush1.msra.mxu0 %v154
      %297 = vmatprep.subr.mxu0 0.0
      %298 = vmatpush1.msra.mxu0 %v155
      %299 = vmatprep.subr.mxu0 0.0
      %300 = vmatpush1.msra.mxu0 %v156
      %301 = vmatprep.subr.mxu0 0.0
      %302 = vmatpush1.msra.mxu0 %v157
      %303 = vmatprep.subr.mxu0 0.0
      %304 = vmatpush1.msra.mxu0 %v158
      %305 = vmatprep.subr.mxu0 0.0
      %306 = vmatpush1.msra.mxu0 %v159
      %307 = vmatprep.subr.mxu0 0.0
      %308 = vmatpush1.msra.mxu0 0.0
      %309 = vmatprep.subr.mxu0 0.0
      %310 = vmatpush1.msra.mxu0 0.0
      %311 = vmatprep.subr.mxu0 0.0
      %312 = vmatpush1.msra.mxu0 0.0
      %313 = vmatprep.subr.mxu0 0.0
      %314 = vmatpush1.msra.mxu0 0.0
      %315 = vmatprep.subr.mxu0 0.0
      %316 = vmatpush1.msra.mxu0 0.0
      %317 = vmatprep.subr.mxu0 0.0
      %318 = vmatpush1.msra.mxu0 0.0
      %319 = vmatprep.subr.mxu0 0.0
      %320 = vmatpush1.msra.mxu0 0.0
      %321 = vmatprep.subr.mxu0 0.0
      %322 = vmatpush1.msra.mxu0 0.0
      %323 = vmatprep.subr.mxu0 0.0
      %324 = vmatpush1.msra.mxu0 0.0
      %325 = vmatprep.subr.mxu0 0.0
      %326 = vmatpush1.msra.mxu0 0.0
      %327 = vmatprep.subr.mxu0 0.0
      %328 = vmatpush1.msra.mxu0 0.0
      %329 = vmatprep.subr.mxu0 0.0
      %330 = vmatpush1.msra.mxu0 0.0
      %331 = vmatprep.subr.mxu0 0.0
      %332 = vmatpush1.msra.mxu0 0.0
      %333 = vmatprep.subr.mxu0 0.0
      %334 = vmatpush1.msra.mxu0 0.0
      %335 = vmatprep.subr.mxu0 0.0
      %336 = vmatpush1.msra.mxu0 0.0
      %337 = vmatprep.subr.mxu0 0.0
      %338 = vmatpush1.msra.mxu0 0.0
      %339 = vmatprep.subr.mxu0 0.0
      %340 = vmatpush1.msra.mxu0 0.0
      %341 = vmatprep.subr.mxu0 0.0
      %342 = vmatpush1.msra.mxu0 0.0
      %343 = vmatprep.subr.mxu0 0.0
      %344 = vmatpush1.msra.mxu0 0.0
      %345 = vmatprep.subr.mxu0 0.0
      %346 = vmatpush1.msra.mxu0 0.0
      %347 = vmatprep.subr.mxu0 0.0
      %348 = vmatpush1.msra.mxu0 0.0
      %349 = vmatprep.subr.mxu0 0.0
      %350 = vmatpush1.msra.mxu0 0.0
      %351 = vmatprep.subr.mxu0 0.0
      %352 = vmatpush1.msra.mxu0 0.0
      %353 = vmatprep.subr.mxu0 0.0
      %354 = vmatpush1.msra.mxu0 0.0
      %355 = vmatprep.subr.mxu0 0.0
      %356 = vmatpush1.msra.mxu0 0.0
      %357 = vmatprep.subr.mxu0 0.0
      %358 = vmatpush1.msra.mxu0 0.0
      %359 = vmatprep.mubr.f32.mxu0 0.0
      %360 = vmatmul.mubr.f32.gmra.mrb[0].mxu0 %v272
      %v361 = vpop.f32.mrb[0].mxu0
      %v362 = vadd.f32 0.0, %v361
      %v363 = vpop.f32.mrb[0].mxu0
      %364 = vmatprep.mubr.f32.mxu0 0.0
      %365 = vmatmul.mubr.f32.gmra.mrb[0].mxu0 %v275
      %v366 = vpop.f32.mrb[0].mxu0
      %v367 = vadd.f32 0.0, %v366
      %v368 = vpop.f32.mrb[0].mxu0
      %369 = vmatprep.mubr.f32.mxu0 0.0
      %370 = vmatmul.mubr.f32.gmra.mrb[0].mxu0 %v278
      %v371 = vpop.f32.mrb[0].mxu0
      %v372 = vadd.f32 0.0, %v371
      %v373 = vpop.f32.mrb[0].mxu0
      %374 = vmatprep.mubr.f32.mxu0 0.0
      %375 = vmatmul.mubr.f32.gmra.mrb[0].mxu0 %v281
      %v376 = vpop.f32.mrb[0].mxu0
      %v377 = vadd.f32 0.0, %v376
      %v378 = vpop.f32.mrb[0].mxu0
      %379 = vmatprep.mubr.f32.mxu0 0.0
      %380 = vmatmul.mubr.f32.gmra.mrb[0].mxu0 %v284
      %v381 = vpop.f32.mrb[0].mxu0
      %v382 = vadd.f32 0.0, %v381
      %v383 = vpop.f32.mrb[0].mxu0
      %384 = vmatprep.mubr.f32.mxu0 0.0
      %385 = vmatmul.mubr.f32.gmra.mrb[0].mxu0 %v287
      %v386 = vpop.f32.mrb[0].mxu0
      %v387 = vadd.f32 0.0, %v386
      %v388 = vpop.f32.mrb[0].mxu0
      %389 = vmatprep.mubr.f32.mxu0 0.0
      %390 = vmatmul.mubr.f32.gmra.mrb[0].mxu0 %v290
      %v391 = vpop.f32.mrb[0].mxu0
      %v392 = vadd.f32 0.0, %v391
      %v393 = vpop.f32.mrb[0].mxu0
      %394 = vmatprep.mubr.f32.mxu0 0.0
      %395 = vmatmul.mubr.f32.gmra.mrb[0].mxu0 %v293
      %v396 = vpop.f32.mrb[0].mxu0
      %v397 = vadd.f32 0.0, %v396
      %v398 = vpop.f32.mrb[0].mxu0
      %399 = vdwg.mxu0
      %v400 = vrsqrt.pop %v362
      %v401 = vmul.f32 %v362, %v400
      %vm402 = vcmp.eq.f32.partialorder %v362, inf
      %v403 = vsel %vm402, %v362, %v401
      %vm404 = vcmp.eq.f32.partialorder %v362, 0.0
      %v405 = vand.u32 %v362, 2147483648
      %v406 = vsel %vm404, %v405, %v403
      %v407 = vrsqrt.pop %v367
      %v408 = vmul.f32 %v367, %v407
      %vm409 = vcmp.eq.f32.partialorder %v367, inf
      %v410 = vsel %vm409, %v367, %v408
      %vm411 = vcmp.eq.f32.partialorder %v367, 0.0
      %v412 = vand.u32 %v367, 2147483648
      %v413 = vsel %vm411, %v412, %v410
      %v414 = vrsqrt.pop %v372
      %v415 = vmul.f32 %v372, %v414
      %vm416 = vcmp.eq.f32.partialorder %v372, inf
      %v417 = vsel %vm416, %v372, %v415
      %vm418 = vcmp.eq.f32.partialorder %v372, 0.0
      %v419 = vand.u32 %v372, 2147483648
      %v420 = vsel %vm418, %v419, %v417
      %v421 = vrsqrt.pop %v377
      %v422 = vmul.f32 %v377, %v421
      %vm423 = vcmp.eq.f32.partialorder %v377, inf
      %v424 = vsel %vm423, %v377, %v422
      %vm425 = vcmp.eq.f32.partialorder %v377, 0.0
      %v426 = vand.u32 %v377, 2147483648
      %v427 = vsel %vm425, %v426, %v424
      %v428 = vrsqrt.pop %v382
      %v429 = vmul.f32 %v382, %v428
      %vm430 = vcmp.eq.f32.partialorder %v382, inf
      %v431 = vsel %vm430, %v382, %v429
      %vm432 = vcmp.eq.f32.partialorder %v382, 0.0
      %v433 = vand.u32 %v382, 2147483648
      %v434 = vsel %vm432, %v433, %v431
      %v435 = vrsqrt.pop %v387
      %v436 = vmul.f32 %v387, %v435
      %vm437 = vcmp.eq.f32.partialorder %v387, inf
      %v438 = vsel %vm437, %v387, %v436
      %vm439 = vcmp.eq.f32.partialorder %v387, 0.0
      %v440 = vand.u32 %v387, 2147483648
      %v441 = vsel %vm439, %v440, %v438
      %v442 = vrsqrt.pop %v392
      %v443 = vmul.f32 %v392, %v442
      %vm444 = vcmp.eq.f32.partialorder %v392, inf
      %v445 = vsel %vm444, %v392, %v443
      %vm446 = vcmp.eq.f32.partialorder %v392, 0.0
      %v447 = vand.u32 %v392, 2147483648
      %v448 = vsel %vm446, %v447, %v445
      %v449 = vrsqrt.pop %v397
      %v450 = vmul.f32 %v397, %v449
      %vm451 = vcmp.eq.f32.partialorder %v397, inf
      %v452 = vsel %vm451, %v397, %v450
      %vm453 = vcmp.eq.f32.partialorder %v397, 0.0
      %v454 = vand.u32 %v397, 2147483648
      %v455 = vsel %vm453, %v454, %v452
      %vm456 = vcmask 48128
      %v457 = vsel %vm456, %v406, 0.0
      %458 = vadd.xlane.f32.xlu0 %v457
      %v459 = vpop.xlane.xlu0 %458
      %v460 = vsel %vm456, %v413, 0.0
      %461 = vadd.xlane.f32.xlu0 %v460
      %v462 = vpop.xlane.xlu0 %461
      %v463 = vsel %vm456, %v420, 0.0
      %464 = vadd.xlane.f32.xlu0 %v463
      %v465 = vpop.xlane.xlu0 %464
      %v466 = vsel %vm456, %v427, 0.0
      %467 = vadd.xlane.f32.xlu0 %v466
      %v468 = vpop.xlane.xlu0 %467
      %v469 = vsel %vm456, %v434, 0.0
      %470 = vadd.xlane.f32.xlu0 %v469
      %v471 = vpop.xlane.xlu0 %470
      %v472 = vsel %vm456, %v441, 0.0
      %473 = vadd.xlane.f32.xlu0 %v472
      %v474 = vpop.xlane.xlu0 %473
      %v475 = vsel %vm456, %v448, 0.0
      %476 = vadd.xlane.f32.xlu0 %v475
      %v477 = vpop.xlane.xlu0 %476
      %v478 = vsel %vm456, %v455, 0.0
      %479 = vadd.xlane.f32.xlu0 %v478
      %v480 = vpop.xlane.xlu0 %479
      %v481 = vrcp.pop 6.0
      %v482 = vmul.f32 %v459, %v481
      %v483 = vmul.f32 %v462, %v481
      %v484 = vmul.f32 %v465, %v481
      %v485 = vmul.f32 %v468, %v481
      %v486 = vmul.f32 %v471, %v481
      %v487 = vmul.f32 %v474, %v481
      %v488 = vmul.f32 %v477, %v481
      %v489 = vmul.f32 %v480, %v481
      %v490 = vsub.f32 %v406, %v482
      %v491 = vsub.f32 %v413, %v483
      %v492 = vsub.f32 %v420, %v484
      %v493 = vsub.f32 %v427, %v485
      %v494 = vsub.f32 %v434, %v486
      %v495 = vsub.f32 %v441, %v487
      %v496 = vsub.f32 %v448, %v488
      %v497 = vsub.f32 %v455, %v489
      %v498 = vmul.f32 %v490, %v490
      %v499 = vmul.f32 %v491, %v491
      %v500 = vmul.f32 %v492, %v492
      %v501 = vmul.f32 %v493, %v493
      %v502 = vmul.f32 %v494, %v494
      %v503 = vmul.f32 %v495, %v495
      %v504 = vmul.f32 %v496, %v496
      %v505 = vmul.f32 %v497, %v497
      %v506 = vsel %vm456, %v498, 0.0
      %507 = vadd.xlane.f32.xlu0 %v506
      %v508 = vpop.xlane.xlu0 %507
      %v509 = vsel %vm456, %v499, 0.0
      %510 = vadd.xlane.f32.xlu0 %v509
      %v511 = vpop.xlane.xlu0 %510
      %v512 = vsel %vm456, %v500, 0.0
      %513 = vadd.xlane.f32.xlu0 %v512
      %v514 = vpop.xlane.xlu0 %513
      %v515 = vsel %vm456, %v501, 0.0
      %516 = vadd.xlane.f32.xlu0 %v515
      %v517 = vpop.xlane.xlu0 %516
      %v518 = vsel %vm456, %v502, 0.0
      %519 = vadd.xlane.f32.xlu0 %v518
      %v520 = vpop.xlane.xlu0 %519
      %v521 = vsel %vm456, %v503, 0.0
      %522 = vadd.xlane.f32.xlu0 %v521
      %v523 = vpop.xlane.xlu0 %522
      %v524 = vsel %vm456, %v504, 0.0
      %525 = vadd.xlane.f32.xlu0 %v524
      %v526 = vpop.xlane.xlu0 %525
      %v527 = vsel %vm456, %v505, 0.0
      %528 = vadd.xlane.f32.xlu0 %v527
      %v529 = vpop.xlane.xlu0 %528
      %v530 = vmul.f32 %v508, %v481
      %v531 = vmul.f32 %v511, %v481
      %v532 = vmul.f32 %v514, %v481
      %v533 = vmul.f32 %v517, %v481
      %v534 = vmul.f32 %v520, %v481
      %v535 = vmul.f32 %v523, %v481
      %v536 = vmul.f32 %v526, %v481
      %v537 = vmul.f32 %v529, %v481
      %v538 = vadd.f32 %v530, 1e-05
      %v539 = vadd.f32 %v531, 1e-05
      %v540 = vadd.f32 %v532, 1e-05
      %v541 = vadd.f32 %v533, 1e-05
      %v542 = vadd.f32 %v534, 1e-05
      %v543 = vadd.f32 %v535, 1e-05
      %v544 = vadd.f32 %v536, 1e-05
      %v545 = vadd.f32 %v537, 1e-05
      %v546 = vrsqrt.pop %v538
      %v547 = vrsqrt.pop %v539
      %v548 = vrsqrt.pop %v540
      %v549 = vrsqrt.pop %v541
      %v550 = vrsqrt.pop %v542
      %v551 = vrsqrt.pop %v543
      %v552 = vrsqrt.pop %v544
      %v553 = vrsqrt.pop %v545
      %v554 = vmul.f32 %v490, %v546
      %v555 = vmul.f32 %v491, %v547
      %v556 = vmul.f32 %v492, %v548
      %v557 = vmul.f32 %v493, %v549
      %v558 = vmul.f32 %v494, %v550
      %v559 = vmul.f32 %v495, %v551
      %v560 = vmul.f32 %v496, %v552
      %v561 = vmul.f32 %v497, %v553
      %v562 = vlaneseq
      %v563 = vshrl.u32 %v562, 7
      %v564 = vsub.s32 0, %v563
      %v565 = vrot.slane %v161, %v564
      %v566 = vmul.f32 %v554, %v565
      %v567 = vmul.f32 %v555, %v565
      %v568 = vmul.f32 %v556, %v565
      %v569 = vmul.f32 %v557, %v565
      %v570 = vmul.f32 %v558, %v565
      %v571 = vmul.f32 %v559, %v565
      %v572 = vmul.f32 %v560, %v565
      %v573 = vmul.f32 %v561, %v565
      %v574 = vlaneseq
      %v575 = vshrl.u32 %v574, 7
      %v576 = vsub.s32 0, %v575
      %v577 = vrot.slane %v162, %v576
      %v578 = vadd.f32 %v566, %v577
      %v579 = vadd.f32 %v567, %v577
      %v580 = vadd.f32 %v568, %v577
      %v581 = vadd.f32 %v569, %v577
      %v582 = vadd.f32 %v570, %v577
      %v583 = vadd.f32 %v571, %v577
      %v584 = vadd.f32 %v572, %v577
      %v585 = vadd.f32 %v573, %v577
      %v586 = vlaneseq
      %v587 = vshrl.u32 %v586, 7
      %v588 = vsub.s32 0, %v587
      %v589 = vrot.slane %v147, %v588
      %591 = vbcast.lane.b32.xlu0 %v589, 256
      %v592 = vpop.permute.xlu0 %591
      %v593 = vlaneseq
      %v594 = vshrl.u32 %v593, 7
      %v595 = vsub.s32 1, %v594
      %v596 = vrot.slane %v147, %v595
      %598 = vbcast.lane.b32.xlu0 %v596, 256
      %v599 = vpop.permute.xlu0 %598
      %v600 = vlaneseq
      %v601 = vshrl.u32 %v600, 7
      %v602 = vsub.s32 2, %v601
      %v603 = vrot.slane %v147, %v602
      %605 = vbcast.lane.b32.xlu0 %v603, 256
      %v606 = vpop.permute.xlu0 %605
      %v607 = vlaneseq
      %v608 = vshrl.u32 %v607, 7
      %v609 = vsub.s32 3, %v608
      %v610 = vrot.slane %v147, %v609
      %612 = vbcast.lane.b32.xlu0 %v610, 256
      %v613 = vpop.permute.xlu0 %612
      %v614 = vlaneseq
      %v615 = vshrl.u32 %v614, 7
      %v616 = vsub.s32 4, %v615
      %v617 = vrot.slane %v147, %v616
      %619 = vbcast.lane.b32.xlu0 %v617, 256
      %v620 = vpop.permute.xlu0 %619
      %v621 = vlaneseq
      %v622 = vshrl.u32 %v621, 7
      %v623 = vsub.s32 5, %v622
      %v624 = vrot.slane %v147, %v623
      %626 = vbcast.lane.b32.xlu0 %v624, 256
      %v627 = vpop.permute.xlu0 %626
      %v628 = vlaneseq
      %v629 = vshrl.u32 %v628, 7
      %v630 = vsub.s32 6, %v629
      %v631 = vrot.slane %v147, %v630
      %633 = vbcast.lane.b32.xlu0 %v631, 256
      %v634 = vpop.permute.xlu0 %633
      %v635 = vlaneseq
      %v636 = vshrl.u32 %v635, 7
      %v637 = vsub.s32 7, %v636
      %v638 = vrot.slane %v147, %v637
      %640 = vbcast.lane.b32.xlu0 %v638, 256
      %v641 = vpop.permute.xlu0 %640
      %vm642 = vcmp.gt.f32.partialorder %v592, 0.5
      %vm643 = vcmp.gt.f32.partialorder %v599, 0.5
      %vm644 = vcmp.gt.f32.partialorder %v606, 0.5
      %vm645 = vcmp.gt.f32.partialorder %v613, 0.5
      %vm646 = vcmp.gt.f32.partialorder %v620, 0.5
      %vm647 = vcmp.gt.f32.partialorder %v627, 0.5
      %vm648 = vcmp.gt.f32.partialorder %v634, 0.5
      %vm649 = vcmp.gt.f32.partialorder %v641, 0.5
      %v650 = vsel %vm642, 1, 0
      %v651 = vsel %vm643, 1, 0
      %v652 = vsel %vm644, 1, 0
      %v653 = vsel %vm645, 1, 0
      %v654 = vsel %vm646, 1, 0
      %v655 = vsel %vm647, 1, 0
      %v656 = vsel %vm648, 1, 0
      %v657 = vsel %vm649, 1, 0
      %vm658 = vcmp.eq.s32.totalorder %v650, 1
      %vm659 = vcmp.eq.s32.totalorder %v651, 1
      %vm660 = vcmp.eq.s32.totalorder %v652, 1
      %vm661 = vcmp.eq.s32.totalorder %v653, 1
      %vm662 = vcmp.eq.s32.totalorder %v654, 1
      %vm663 = vcmp.eq.s32.totalorder %v655, 1
      %vm664 = vcmp.eq.s32.totalorder %v656, 1
      %vm665 = vcmp.eq.s32.totalorder %v657, 1
      %v666 = vsel %vm658, %v578, 0.0
      %v667 = vsel %vm659, %v579, 0.0
      %v668 = vsel %vm660, %v580, 0.0
      %v669 = vsel %vm661, %v581, 0.0
      %v670 = vsel %vm662, %v582, 0.0
      %v671 = vsel %vm663, %v583, 0.0
      %v672 = vsel %vm664, %v584, 0.0
      %v673 = vsel %vm665, %v585, 0.0
      %v674 = vsel %vm456, %v666, -inf
      %v675 = vrot.slane %v674, 4
      %v676 = vmax.f32 %v674, %v675
      %v677 = vrot.slane %v676, 2
      %v678 = vmax.f32 %v676, %v677
      %v679 = vrot.slane %v678, 1
      %v680 = vmax.f32 %v678, %v679
      %v681 = vsel %vm456, %v667, -inf
      %v682 = vrot.slane %v681, 4
      %v683 = vmax.f32 %v681, %v682
      %v684 = vrot.slane %v683, 2
      %v685 = vmax.f32 %v683, %v684
      %v686 = vrot.slane %v685, 1
      %v687 = vmax.f32 %v685, %v686
      %v688 = vsel %vm456, %v668, -inf
      %v689 = vrot.slane %v688, 4
      %v690 = vmax.f32 %v688, %v689
      %v691 = vrot.slane %v690, 2
      %v692 = vmax.f32 %v690, %v691
      %v693 = vrot.slane %v692, 1
      %v694 = vmax.f32 %v692, %v693
      %v695 = vsel %vm456, %v669, -inf
      %v696 = vrot.slane %v695, 4
      %v697 = vmax.f32 %v695, %v696
      %v698 = vrot.slane %v697, 2
      %v699 = vmax.f32 %v697, %v698
      %v700 = vrot.slane %v699, 1
      %v701 = vmax.f32 %v699, %v700
      %v702 = vsel %vm456, %v670, -inf
      %v703 = vrot.slane %v702, 4
      %v704 = vmax.f32 %v702, %v703
      %v705 = vrot.slane %v704, 2
      %v706 = vmax.f32 %v704, %v705
      %v707 = vrot.slane %v706, 1
      %v708 = vmax.f32 %v706, %v707
      %v709 = vsel %vm456, %v671, -inf
      %v710 = vrot.slane %v709, 4
      %v711 = vmax.f32 %v709, %v710
      %v712 = vrot.slane %v711, 2
      %v713 = vmax.f32 %v711, %v712
      %v714 = vrot.slane %v713, 1
      %v715 = vmax.f32 %v713, %v714
      %v716 = vsel %vm456, %v672, -inf
      %v717 = vrot.slane %v716, 4
      %v718 = vmax.f32 %v716, %v717
      %v719 = vrot.slane %v718, 2
      %v720 = vmax.f32 %v718, %v719
      %v721 = vrot.slane %v720, 1
      %v722 = vmax.f32 %v720, %v721
      %v723 = vsel %vm456, %v673, -inf
      %v724 = vrot.slane %v723, 4
      %v725 = vmax.f32 %v723, %v724
      %v726 = vrot.slane %v725, 2
      %v727 = vmax.f32 %v725, %v726
      %v728 = vrot.slane %v727, 1
      %v729 = vmax.f32 %v727, %v728
      %v730 = vsub.f32 %v666, %v680
      %v731 = vsub.f32 %v667, %v687
      %v732 = vsub.f32 %v668, %v694
      %v733 = vsub.f32 %v669, %v701
      %v734 = vsub.f32 %v670, %v708
      %v735 = vsub.f32 %v671, %v715
      %v736 = vsub.f32 %v672, %v722
      %v737 = vsub.f32 %v673, %v729
      %v738 = vmul.f32 %v730, 1.442695
      %v739 = vpow.pop %v738
      %v740 = vmul.f32 %v731, 1.442695
      %v741 = vpow.pop %v740
      %v742 = vmul.f32 %v732, 1.442695
      %v743 = vpow.pop %v742
      %v744 = vmul.f32 %v733, 1.442695
      %v745 = vpow.pop %v744
      %v746 = vmul.f32 %v734, 1.442695
      %v747 = vpow.pop %v746
      %v748 = vmul.f32 %v735, 1.442695
      %v749 = vpow.pop %v748
      %v750 = vmul.f32 %v736, 1.442695
      %v751 = vpow.pop %v750
      %v752 = vmul.f32 %v737, 1.442695
      %v753 = vpow.pop %v752
      %v754 = vsel %vm456, %v739, 0.0
      %v755 = vrot.slane %v754, 4
      %v756 = vadd.f32 %v754, %v755
      %v757 = vrot.slane %v756, 2
      %v758 = vadd.f32 %v756, %v757
      %v759 = vrot.slane %v758, 1
      %v760 = vadd.f32 %v758, %v759
      %v761 = vsel %vm456, %v741, 0.0
      %v762 = vrot.slane %v761, 4
      %v763 = vadd.f32 %v761, %v762
      %v764 = vrot.slane %v763, 2
      %v765 = vadd.f32 %v763, %v764
      %v766 = vrot.slane %v765, 1
      %v767 = vadd.f32 %v765, %v766
      %v768 = vsel %vm456, %v743, 0.0
      %v769 = vrot.slane %v768, 4
      %v770 = vadd.f32 %v768, %v769
      %v771 = vrot.slane %v770, 2
      %v772 = vadd.f32 %v770, %v771
      %v773 = vrot.slane %v772, 1
      %v774 = vadd.f32 %v772, %v773
      %v775 = vsel %vm456, %v745, 0.0
      %v776 = vrot.slane %v775, 4
      %v777 = vadd.f32 %v775, %v776
      %v778 = vrot.slane %v777, 2
      %v779 = vadd.f32 %v777, %v778
      %v780 = vrot.slane %v779, 1
      %v781 = vadd.f32 %v779, %v780
      %v782 = vsel %vm456, %v747, 0.0
      %v783 = vrot.slane %v782, 4
      %v784 = vadd.f32 %v782, %v783
      %v785 = vrot.slane %v784, 2
      %v786 = vadd.f32 %v784, %v785
      %v787 = vrot.slane %v786, 1
      %v788 = vadd.f32 %v786, %v787
      %v789 = vsel %vm456, %v749, 0.0
      %v790 = vrot.slane %v789, 4
      %v791 = vadd.f32 %v789, %v790
      %v792 = vrot.slane %v791, 2
      %v793 = vadd.f32 %v791, %v792
      %v794 = vrot.slane %v793, 1
      %v795 = vadd.f32 %v793, %v794
      %v796 = vsel %vm456, %v751, 0.0
      %v797 = vrot.slane %v796, 4
      %v798 = vadd.f32 %v796, %v797
      %v799 = vrot.slane %v798, 2
      %v800 = vadd.f32 %v798, %v799
      %v801 = vrot.slane %v800, 1
      %v802 = vadd.f32 %v800, %v801
      %v803 = vsel %vm456, %v753, 0.0
      %v804 = vrot.slane %v803, 4
      %v805 = vadd.f32 %v803, %v804
      %v806 = vrot.slane %v805, 2
      %v807 = vadd.f32 %v805, %v806
      %v808 = vrot.slane %v807, 1
      %v809 = vadd.f32 %v807, %v808
      %v810 = vrcp.pop %v760
      %v811 = vmul.f32 %v739, %v810
      %v812 = vrcp.pop %v767
      %v813 = vmul.f32 %v741, %v812
      %v814 = vrcp.pop %v774
      %v815 = vmul.f32 %v743, %v814
      %v816 = vrcp.pop %v781
      %v817 = vmul.f32 %v745, %v816
      %v818 = vrcp.pop %v788
      %v819 = vmul.f32 %v747, %v818
      %v820 = vrcp.pop %v795
      %v821 = vmul.f32 %v749, %v820
      %v822 = vrcp.pop %v802
      %v823 = vmul.f32 %v751, %v822
      %v824 = vrcp.pop %v809
      %v825 = vmul.f32 %v753, %v824
      %v827 = vsel %vm456, %v811, 0
      %v830 = vsel %vm456, %v813, 0
      %v833 = vsel %vm456, %v815, 0
      %v836 = vsel %vm456, %v817, 0
      %v839 = vsel %vm456, %v819, 0
      %v842 = vsel %vm456, %v821, 0
      %v845 = vsel %vm456, %v823, 0
      %v848 = vsel %vm456, %v825, 0
      %vm850 = vcmask 1045504
      %v852 = vsel %vm850, %v160, 0
      %854 = vmatprep.subr.mxu0 0.0
      %855 = vmatpush1.msra.mxu0 %v852
      %856 = vmatprep.subr.mxu0 0.0
      %857 = vmatpush1.msra.mxu0 0.0
      %858 = vmatprep.subr.mxu0 0.0
      %859 = vmatpush1.msra.mxu0 0.0
      %860 = vmatprep.subr.mxu0 0.0
      %861 = vmatpush1.msra.mxu0 0.0
      %862 = vmatprep.subr.mxu0 0.0
      %863 = vmatpush1.msra.mxu0 0.0
      %864 = vmatprep.subr.mxu0 0.0
      %865 = vmatpush1.msra.mxu0 0.0
      %866 = vmatprep.subr.mxu0 0.0
      %867 = vmatpush1.msra.mxu0 0.0
      %868 = vmatprep.subr.mxu0 0.0
      %869 = vmatpush1.msra.mxu0 0.0
      %870 = vmatprep.subr.mxu0 0.0
      %871 = vmatpush1.msra.mxu0 0.0
      %872 = vmatprep.subr.mxu0 0.0
      %873 = vmatpush1.msra.mxu0 0.0
      %874 = vmatprep.subr.mxu0 0.0
      %875 = vmatpush1.msra.mxu0 0.0
      %876 = vmatprep.subr.mxu0 0.0
      %877 = vmatpush1.msra.mxu0 0.0
      %878 = vmatprep.subr.mxu0 0.0
      %879 = vmatpush1.msra.mxu0 0.0
      %880 = vmatprep.subr.mxu0 0.0
      %881 = vmatpush1.msra.mxu0 0.0
      %882 = vmatprep.subr.mxu0 0.0
      %883 = vmatpush1.msra.mxu0 0.0
      %884 = vmatprep.subr.mxu0 0.0
      %885 = vmatpush1.msra.mxu0 0.0
      %886 = vmatprep.subr.mxu0 0.0
      %887 = vmatpush1.msra.mxu0 0.0
      %888 = vmatprep.subr.mxu0 0.0
      %889 = vmatpush1.msra.mxu0 0.0
      %890 = vmatprep.subr.mxu0 0.0
      %891 = vmatpush1.msra.mxu0 0.0
      %892 = vmatprep.subr.mxu0 0.0
      %893 = vmatpush1.msra.mxu0 0.0
      %894 = vmatprep.subr.mxu0 0.0
      %895 = vmatpush1.msra.mxu0 0.0
      %896 = vmatprep.subr.mxu0 0.0
      %897 = vmatpush1.msra.mxu0 0.0
      %898 = vmatprep.subr.mxu0 0.0
      %899 = vmatpush1.msra.mxu0 0.0
      %900 = vmatprep.subr.mxu0 0.0
      %901 = vmatpush1.msra.mxu0 0.0
      %902 = vmatprep.subr.mxu0 0.0
      %903 = vmatpush1.msra.mxu0 0.0
      %904 = vmatprep.subr.mxu0 0.0
      %905 = vmatpush1.msra.mxu0 0.0
      %906 = vmatprep.subr.mxu0 0.0
      %907 = vmatpush1.msra.mxu0 0.0
      %908 = vmatprep.subr.mxu0 0.0
      %909 = vmatpush1.msra.mxu0 0.0
      %910 = vmatprep.subr.mxu0 0.0
      %911 = vmatpush1.msra.mxu0 0.0
      %912 = vmatprep.subr.mxu0 0.0
      %913 = vmatpush1.msra.mxu0 0.0
      %914 = vmatprep.subr.mxu0 0.0
      %915 = vmatpush1.msra.mxu0 0.0
      %916 = vmatprep.subr.mxu0 0.0
      %917 = vmatpush1.msra.mxu0 0.0
      %918 = vmatprep.mubr.f32.mxu0 0.0
      %919 = vmatmul.mubr.f32.gmra.mrb[0].mxu0 %v827
      %v920 = vpop.f32.mrb[0].mxu0
      %v921 = vadd.f32 0.0, %v920
      %v922 = vpop.f32.mrb[0].mxu0
      %923 = vmatprep.mubr.f32.mxu0 0.0
      %924 = vmatmul.mubr.f32.gmra.mrb[0].mxu0 %v830
      %v925 = vpop.f32.mrb[0].mxu0
      %v926 = vadd.f32 0.0, %v925
      %v927 = vpop.f32.mrb[0].mxu0
      %928 = vmatprep.mubr.f32.mxu0 0.0
      %929 = vmatmul.mubr.f32.gmra.mrb[0].mxu0 %v833
      %v930 = vpop.f32.mrb[0].mxu0
      %v931 = vadd.f32 0.0, %v930
      %v932 = vpop.f32.mrb[0].mxu0
      %933 = vmatprep.mubr.f32.mxu0 0.0
      %934 = vmatmul.mubr.f32.gmra.mrb[0].mxu0 %v836
      %v935 = vpop.f32.mrb[0].mxu0
      %v936 = vadd.f32 0.0, %v935
      %v937 = vpop.f32.mrb[0].mxu0
      %938 = vmatprep.mubr.f32.mxu0 0.0
      %939 = vmatmul.mubr.f32.gmra.mrb[0].mxu0 %v839
      %v940 = vpop.f32.mrb[0].mxu0
      %v941 = vadd.f32 0.0, %v940
      %v942 = vpop.f32.mrb[0].mxu0
      %943 = vmatprep.mubr.f32.mxu0 0.0
      %944 = vmatmul.mubr.f32.gmra.mrb[0].mxu0 %v842
      %v945 = vpop.f32.mrb[0].mxu0
      %v946 = vadd.f32 0.0, %v945
      %v947 = vpop.f32.mrb[0].mxu0
      %948 = vmatprep.mubr.f32.mxu0 0.0
      %949 = vmatmul.mubr.f32.gmra.mrb[0].mxu0 %v845
      %v950 = vpop.f32.mrb[0].mxu0
      %v951 = vadd.f32 0.0, %v950
      %v952 = vpop.f32.mrb[0].mxu0
      %953 = vmatprep.mubr.f32.mxu0 0.0
      %954 = vmatmul.mubr.f32.gmra.mrb[0].mxu0 %v848
      %v955 = vpop.f32.mrb[0].mxu0
      %v956 = vadd.f32 0.0, %v955
      %v957 = vpop.f32.mrb[0].mxu0
      %958 = vdwg.mxu0
      %v959 = vmul.f32 %v921, %v146
      %v960 = vmul.f32 %v926, %v146
      %v961 = vmul.f32 %v931, %v146
      %v962 = vmul.f32 %v936, %v146
      %v963 = vmul.f32 %v941, %v146
      %v964 = vmul.f32 %v946, %v146
      %v965 = vmul.f32 %v951, %v146
      %v966 = vmul.f32 %v956, %v146
      %v967 = vsel %vm270, %v959, 0.0
      %v968 = vrot.slane %v967, 4
      %v969 = vadd.f32 %v967, %v968
      %v970 = vrot.slane %v969, 2
      %v971 = vadd.f32 %v969, %v970
      %v972 = vrot.slane %v971, 1
      %v973 = vadd.f32 %v971, %v972
      %v974 = vsel %vm270, %v960, 0.0
      %v975 = vrot.slane %v974, 4
      %v976 = vadd.f32 %v974, %v975
      %v977 = vrot.slane %v976, 2
      %v978 = vadd.f32 %v976, %v977
      %v979 = vrot.slane %v978, 1
      %v980 = vadd.f32 %v978, %v979
      %v981 = vsel %vm270, %v961, 0.0
      %v982 = vrot.slane %v981, 4
      %v983 = vadd.f32 %v981, %v982
      %v984 = vrot.slane %v983, 2
      %v985 = vadd.f32 %v983, %v984
      %v986 = vrot.slane %v985, 1
      %v987 = vadd.f32 %v985, %v986
      %v988 = vsel %vm270, %v962, 0.0
      %v989 = vrot.slane %v988, 4
      %v990 = vadd.f32 %v988, %v989
      %v991 = vrot.slane %v990, 2
      %v992 = vadd.f32 %v990, %v991
      %v993 = vrot.slane %v992, 1
      %v994 = vadd.f32 %v992, %v993
      %v995 = vsel %vm270, %v963, 0.0
      %v996 = vrot.slane %v995, 4
      %v997 = vadd.f32 %v995, %v996
      %v998 = vrot.slane %v997, 2
      %v999 = vadd.f32 %v997, %v998
      %v1000 = vrot.slane %v999, 1
      %v1001 = vadd.f32 %v999, %v1000
      %v1002 = vsel %vm270, %v964, 0.0
      %v1003 = vrot.slane %v1002, 4
      %v1004 = vadd.f32 %v1002, %v1003
      %v1005 = vrot.slane %v1004, 2
      %v1006 = vadd.f32 %v1004, %v1005
      %v1007 = vrot.slane %v1006, 1
      %v1008 = vadd.f32 %v1006, %v1007
      %v1009 = vsel %vm270, %v965, 0.0
      %v1010 = vrot.slane %v1009, 4
      %v1011 = vadd.f32 %v1009, %v1010
      %v1012 = vrot.slane %v1011, 2
      %v1013 = vadd.f32 %v1011, %v1012
      %v1014 = vrot.slane %v1013, 1
      %v1015 = vadd.f32 %v1013, %v1014
      %v1016 = vsel %vm270, %v966, 0.0
      %v1017 = vrot.slane %v1016, 4
      %v1018 = vadd.f32 %v1016, %v1017
      %v1019 = vrot.slane %v1018, 2
      %v1020 = vadd.f32 %v1018, %v1019
      %v1021 = vrot.slane %v1020, 1
      %v1022 = vadd.f32 %v1020, %v1021
      %v1023 = vlaneseq
      %v1024 = vshrl.u32 %v1023, 7
      %v1025 = vsub.s32 0, %v1024
      %v1026 = vrot.slane %v163, %v1025
      %vm1035 = vcmask 1041409
      %v1036 = vsel %vm1035, %v980, %v973
      %vm1037 = vcmask 1042434
      %v1038 = vsel %vm1037, %v987, %v1036
      %vm1039 = vcmask 1043459
      %v1040 = vsel %vm1039, %v994, %v1038
      %vm1041 = vcmask 1044484
      %v1042 = vsel %vm1041, %v1001, %v1040
      %vm1043 = vcmask 1045509
      %v1044 = vsel %vm1043, %v1008, %v1042
      %vm1045 = vcmask 1046534
      %v1046 = vsel %vm1045, %v1015, %v1044
      %vm1047 = vcmask 1047559
      %v1048 = vsel %vm1047, %v1022, %v1046
      %v1049 = vsel %vm270, %v1048, 0
      %1051 = vmatprep.subr.mxu0 0.0
      %1052 = vmatpush1.msra.mxu0 %v148
      %1053 = vmatprep.subr.mxu0 0.0
      %1054 = vmatpush1.msra.mxu0 %v149
      %1055 = vmatprep.subr.mxu0 0.0
      %1056 = vmatpush1.msra.mxu0 %v150
      %1057 = vmatprep.subr.mxu0 0.0
      %1058 = vmatpush1.msra.mxu0 %v151
      %1059 = vmatprep.subr.mxu0 0.0
      %1060 = vmatpush1.msra.mxu0 %v152
      %1061 = vmatprep.subr.mxu0 0.0
      %1062 = vmatpush1.msra.mxu0 %v153
      %1063 = vmatprep.subr.mxu0 0.0
      %1064 = vmatpush1.msra.mxu0 0.0
      %1065 = vmatprep.subr.mxu0 0.0
      %1066 = vmatpush1.msra.mxu0 0.0
      %1067 = vmatprep.subr.mxu0 0.0
      %1068 = vmatpush1.msra.mxu0 0.0
      %1069 = vmatprep.subr.mxu0 0.0
      %1070 = vmatpush1.msra.mxu0 0.0
      %1071 = vmatprep.subr.mxu0 0.0
      %1072 = vmatpush1.msra.mxu0 0.0
      %1073 = vmatprep.subr.mxu0 0.0
      %1074 = vmatpush1.msra.mxu0 0.0
      %1075 = vmatprep.subr.mxu0 0.0
      %1076 = vmatpush1.msra.mxu0 0.0
      %1077 = vmatprep.subr.mxu0 0.0
      %1078 = vmatpush1.msra.mxu0 0.0
      %1079 = vmatprep.subr.mxu0 0.0
      %1080 = vmatpush1.msra.mxu0 0.0
      %1081 = vmatprep.subr.mxu0 0.0
      %1082 = vmatpush1.msra.mxu0 0.0
      %1083 = vmatprep.subr.mxu0 0.0
      %1084 = vmatpush1.msra.mxu0 0.0
      %1085 = vmatprep.subr.mxu0 0.0
      %1086 = vmatpush1.msra.mxu0 0.0
      %1087 = vmatprep.subr.mxu0 0.0
      %1088 = vmatpush1.msra.mxu0 0.0
      %1089 = vmatprep.subr.mxu0 0.0
      %1090 = vmatpush1.msra.mxu0 0.0
      %1091 = vmatprep.subr.mxu0 0.0
      %1092 = vmatpush1.msra.mxu0 0.0
      %1093 = vmatprep.subr.mxu0 0.0
      %1094 = vmatpush1.msra.mxu0 0.0
      %1095 = vmatprep.subr.mxu0 0.0
      %1096 = vmatpush1.msra.mxu0 0.0
      %1097 = vmatprep.subr.mxu0 0.0
      %1098 = vmatpush1.msra.mxu0 0.0
      %1099 = vmatprep.subr.mxu0 0.0
      %1100 = vmatpush1.msra.mxu0 0.0
      %1101 = vmatprep.subr.mxu0 0.0
      %1102 = vmatpush1.msra.mxu0 0.0
      %1103 = vmatprep.subr.mxu0 0.0
      %1104 = vmatpush1.msra.mxu0 0.0
      %1105 = vmatprep.subr.mxu0 0.0
      %1106 = vmatpush1.msra.mxu0 0.0
      %1107 = vmatprep.subr.mxu0 0.0
      %1108 = vmatpush1.msra.mxu0 0.0
      %1109 = vmatprep.subr.mxu0 0.0
      %1110 = vmatpush1.msra.mxu0 0.0
      %1111 = vmatprep.subr.mxu0 0.0
      %1112 = vmatpush1.msra.mxu0 0.0
      %1113 = vmatprep.subr.mxu0 0.0
      %1114 = vmatpush1.msra.mxu0 0.0
      %1115 = vmatprep.mubr.f32.mxu0 0.0
      %1116 = vmatmul.mubr.f32.gmra.mrb[0].mxu0 %v1049
      %v1117 = vpop.f32.mrb[0].mxu0
      %v1118 = vadd.f32 %v1026, %v1117
      %v1119 = vpop.f32.mrb[0].mxu0
      %1120 = vdwg.mxu0
      %v1121 = vsel %vm456, %v1118, -inf
      %1122 = vmax.xlane.f32.xlu0 %v1121
      %v1123 = vpop.xlane.xlu0 %1122
      %v1124 = vsub.f32 %v1118, %v1123
      %v1125 = vmul.f32 %v1124, 1.442695
      %v1126 = vpow.pop %v1125
      %v1127 = vsel %vm456, %v1126, 0.0
      %1128 = vadd.xlane.f32.xlu0 %v1127
      %v1129 = vpop.xlane.xlu0 %1128
      %v1130 = vrcp.pop %v1129
      %v1131 = vmul.f32 %v1126, %v1130
      %v1132 = vsel %vm456, %v811, 0.0
      %v1133 = vsel %vm456, %v813, 0.0
      %v1134 = vadd.f32 %v1132, %v1133
      %v1135 = vsel %vm456, %v815, 0.0
      %v1136 = vadd.f32 %v1134, %v1135
      %v1137 = vsel %vm456, %v817, 0.0
      %v1138 = vadd.f32 %v1136, %v1137
      %v1139 = vsel %vm456, %v819, 0.0
      %v1140 = vadd.f32 %v1138, %v1139
      %v1141 = vsel %vm456, %v821, 0.0
      %v1142 = vadd.f32 %v1140, %v1141
      %v1143 = vsel %vm456, %v823, 0.0
      %v1144 = vadd.f32 %v1142, %v1143
      %v1145 = vsel %vm456, %v825, 0.0
      %v1146 = vadd.f32 %v1144, %v1145
      %v1147 = vsel %vm456, %v1146, 0.0
      %1148 = vadd.xlane.f32.xlu0 %v1147
      %v1149 = vpop.xlane.xlu0 %1148
      %v1150 = vmul.f32 %v1149, %v481
      %v1151 = vmul.f32 %v1150, %v147
      %1153 = vrot.lane.b32.xlu0 %v147, 127
      %v1154 = vpop.permute.xlu0 %1153
      %v1156 = vadd.f32 %v1151, %v1154
      %vm1157 = vcmask 72768
      %v1158 = vsel %vm1157, %v1156, -inf
      %v1159 = vrot.slane %v1158, 4
      %v1160 = vmax.f32 %v1158, %v1159
      %v1161 = vrot.slane %v1160, 2
      %v1162 = vmax.f32 %v1160, %v1161
      %v1163 = vrot.slane %v1162, 1
      %v1164 = vmax.f32 %v1162, %v1163
      %v1165 = vsub.f32 %v1156, %v1164
      %v1166 = vmul.f32 %v1165, 1.442695
      %v1167 = vpow.pop %v1166
      %v1168 = vsel %vm1157, %v1167, 0.0
      %v1169 = vrot.slane %v1168, 4
      %v1170 = vadd.f32 %v1168, %v1169
      %v1171 = vrot.slane %v1170, 2
      %v1172 = vadd.f32 %v1170, %v1171
      %v1173 = vrot.slane %v1172, 1
      %v1174 = vadd.f32 %v1172, %v1173
      %v1175 = vrcp.pop %v1174
      %v1176 = vmul.f32 %v1167, %v1175
      %vm1177 = vcmp.ne.f32.partialorder %v1176, %v1176
      %v1178 = vsel %vm1177, 0.0, %v1176
      %1180 = vset.pattern.permute.xlu0 8
      %1181 = vperm.xlu0 %1180, %v1178
      %v1182 = vpop.permute.xlu0 %1181
      %v1184 = vmul.f32 %v1131, %v1182
      %v1185 = vsel %vm456, %v1184, 0.0
      %v1186 = vrot.slane %v1185, 4
      %v1187 = vadd.f32 %v1185, %v1186
      %v1188 = vrot.slane %v1187, 2
      %v1189 = vadd.f32 %v1187, %v1188
      %v1190 = vrot.slane %v1189, 1
      %v1191 = vadd.f32 %v1189, %v1190
      %vm1192 = vcmask 31744
      %v1193 = vsel %vm1192, %v1191, -inf
      %1194 = vmax.xlane.f32.xlu0 %v1193
      %v1195 = vpop.xlane.xlu0 %1194
      %v1196 = vsub.f32 %v1191, %v1195
      %v1197 = vmul.f32 %v1196, 1.442695
      %v1198 = vpow.pop %v1197
      %v1199 = vsel %vm1192, %v1198, 0.0
      %1200 = vadd.xlane.f32.xlu0 %v1199
      %v1201 = vpop.xlane.xlu0 %1200
      %v1202 = vrcp.pop %v1201
      %v1203 = vmul.f32 %v1198, %v1202
      %v1204 = vsel %vm456, %v1131, 0.0
      %v1205 = vsel %vm1192, %v1203, 0.0
      %1206 = vst [vmem:[%s143] sm:$0xff] %v1204
      %1207 = vst [vmem:[%s143 + $0x8] sm:$0xff] %v1205
      %p1208 = scmp.lt.s32.totalorder %s13, 1
      %s1209 = scalar_select %p1208, %s13, 1
      %s1210 = smul.addr %s1209, 2
      %s1211 = smul.addr %s1210, 8
      %s1212 = scalar_lea.vmem %s2, %s1211
      // Predicated region
      $region29: #{attention_tfidf_forward.1} parent=27 // pred_check
        %p1213 = pneg %p78
      $region30: #{attention_tfidf_forward.1} parent=27 // pred_check_branch
        %1215 = sbr.rel (%p1213) target = $region32
      $region31: #{attention_tfidf_forward.1} parent=27 // pred_region
        _
      $region32: #{attention_tfidf_forward.1} parent=27 // pred_fallthru
        _
    $region28: #{attention_tfidf_forward.1} parent=5 // pred_fallthru
      _
    %p1216 = scmp.le.s32.totalorder 2, %s8
    // Predicated region
    $region33: #{attention_tfidf_forward.1} parent=5 // pred_check
      %p1217 = pneg %p1216
    $region34: #{attention_tfidf_forward.1} parent=5 // pred_check_branch
      %1219 = sbr.rel (%p1217) target = $region36
    $region35: #{attention_tfidf_forward.1} parent=5 // pred_region
      %s1220 = ssub.s32 %s8, 2
      // Predicated region
      $region37: #{attention_tfidf_forward.1} parent=35 // pred_check
        %p1221 = pneg %p84
      $region38: #{attention_tfidf_forward.1} parent=35 // pred_check_branch
        %1223 = sbr.rel (%p1221) target = $region40
      $region39: #{attention_tfidf_forward.1} parent=35 // pred_region
        %p1224 = scmp.lt.s32.totalorder %s14, 1
        %s1225 = scalar_select %p1224, %s14, 1
        %s1226 = smul.addr %s1225, 2
        %s1227 = smul.addr %s1226, 8
        %s1228 = scalar_lea.vmem %s2, %s1227
      $region40: #{attention_tfidf_forward.1} parent=35 // pred_fallthru
        _
    $region36: #{attention_tfidf_forward.1} parent=5 // pred_fallthru
      _
  $region6: #{attention_tfidf_forward.1} parent=0 // loop_footer
    %s12 = sadd.s32 1, %s8
  $region7: #{attention_tfidf_forward.1} parent=0 // loop_footer_branch
    %7 = sbr.rel target = $region3
  $region8: #{attention_tfidf_forward.1} parent=0 // loop_exit
    _

</llo_original>
